<compile_context>
chip_gen: v5e
topology: v5e:2x2
jax: 0.10.0
libtpu: 0.0.40
codegen_flags: <defaults>
</compile_context>

<pallas_src>
import math

import jax
import jax.numpy as jnp
import numpy as np
from jax.experimental import pallas as pl
from jax.experimental.pallas import tpu as pltpu

# ---- small "LlamaConfig"-consistent shapes --------------------------------
B = 2            # batch
S = 8            # q_len == kv_seq_len (no past_key_value)
H = 32           # hidden_size
NH = 4           # num_attention_heads
HD = H // NH     # head_dim
T = B * S        # flattened token count handled by one kernel invocation
F32_MIN = float(np.finfo(np.float32).min)


def _rotate_half(x):
    half = x.shape[-1] // 2
    return jnp.concatenate([-x[..., half:], x[..., :half]], axis=-1)


def _rotate_half_rows(w):
    """Compose rotate_half into a (out, in) projection weight, per head.

    (x @ w_rot.T) == rotate_half(x @ w.T) applied per head on the last dim.
    """
    w3 = w.reshape(NH, HD, H)
    return jnp.concatenate([-w3[:, HD // 2:, :], w3[:, :HD // 2, :]],
                           axis=1).reshape(H, H)


def _block_diag_mask(mask):
    """(B, S, S) additive mask -> (B*S, B*S) block-diagonal additive mask.

    Cross-batch blocks get F32_MIN, so after the clamp + softmax they
    contribute exactly 0 (exp underflows to 0.0 in f32); this lets the kernel
    treat all B*S tokens as one sequence with no batched/3D ops.
    """
    bsz, s, _ = mask.shape
    full = jnp.full((bsz, s, bsz, s), F32_MIN, dtype=mask.dtype)
    full = full.at[jnp.arange(bsz), :, jnp.arange(bsz), :].set(mask)
    return full.reshape(bsz * s, bsz * s)


# ---------------------------- Pallas kernel --------------------------------
def attention_kernel(x_ref, w_fused_ref, wo_t_ref, cos_ref, sin_ref,
                     mask_ref, out_ref):
    x = x_ref[...]            # (T, H)   flattened (batch*seq, hidden)
    w = w_fused_ref[...]      # (H, 5H)  [Wq/s | rot(Wq)/s | Wk | rot(Wk) | Wv]^T
    wo_t = wo_t_ref[...]      # (H, H)   o_proj weight, pre-transposed
    cosf = cos_ref[...]       # (T, H)   per-head-tiled RoPE tables
    sinf = sin_ref[...]       # (T, H)
    mask = mask_ref[...]      # (T, T)   block-diagonal additive mask

    # Single fused projection (one MXU op instead of three).
    qkv = jnp.dot(x, w, preferred_element_type=jnp.float32)      # (T, 5H)

    # RoPE as pure elementwise VPU work (rotate_half folded into the weights,
    # 1/sqrt(HD) already folded into the q columns).
    q = qkv[:, 0 * H:1 * H] * cosf + qkv[:, 1 * H:2 * H] * sinf   # (T, H)
    k = qkv[:, 2 * H:3 * H] * cosf + qkv[:, 3 * H:4 * H] * sinf   # (T, H)
    v = qkv[:, 4 * H:5 * H]                                       # (T, H)

    out = jnp.zeros((T, H), jnp.float32)
    for h in range(NH):                     # static unroll over 4 heads
        lo, hi = h * HD, (h + 1) * HD
        qh = q[:, lo:hi]                    # (T, HD)
        kh = k[:, lo:hi]
        vh = v[:, lo:hi]

        # Scores over all T tokens at once (batch handled by the mask).
        scores = jnp.einsum('qd,kd->qk', qh, kh,
                            preferred_element_type=jnp.float32)   # (T, T)
        scores = scores + mask
        scores = jnp.maximum(scores, F32_MIN)        # torch.max(..., finfo.min)

        # float32 softmax (exact divide: approx reciprocal may miss 1e-5 rtol).
        scores = scores - jnp.max(scores, axis=-1, keepdims=True)
        p = jnp.exp(scores)
        p = p / jnp.sum(p, axis=-1, keepdims=True)

        oh = jnp.dot(p, vh, preferred_element_type=jnp.float32)   # (T, HD)
        # Accumulate the output projection per head (replaces the lane-axis
        # concatenate of head outputs with an MXU accumulate).
        out = out + jnp.dot(oh, wo_t[lo:hi, :],
                            preferred_element_type=jnp.float32)

    out_ref[...] = out.astype(out_ref.dtype)


# ------------------------------- wrapper ------------------------------------
def softmask_llama_attention(x, wq, wk, wv, wo, cos, sin, mask):
    """x: (B, S, H); weights: (H, H) PyTorch (out, in); cos/sin: (S, HD);
    mask: (B, S, S) additive attention mask."""
    bsz, q_len, hidden = x.shape
    tokens = bsz * q_len
    scale = 1.0 / math.sqrt(HD)

    # ---- one-time parameter/layout plumbing (wrapper-side, outside kernel) --
    w_fused = jnp.concatenate(
        [wq * scale, _rotate_half_rows(wq) * scale,
         wk, _rotate_half_rows(wk), wv],
        axis=0).T                                        # (H, 5H) pre-transposed
    wo_t = wo.T                                          # (H, H)  pre-transposed
    cos_f = jnp.tile(jnp.tile(cos, (1, NH)), (bsz, 1))   # (B*S, H)
    sin_f = jnp.tile(jnp.tile(sin, (1, NH)), (bsz, 1))   # (B*S, H)
    mask_bd = _block_diag_mask(mask)                     # (B*S, B*S)
    x2 = x.reshape(tokens, hidden)                       # (B*S, H)

    out2 = pl.pallas_call(
        attention_kernel,
        out_shape=jax.ShapeDtypeStruct((tokens, hidden), x.dtype),
        grid=(1,),   # single invocation: whole problem is a few vregs
        in_specs=[
            pl.BlockSpec((tokens, hidden), lambda i: (0, 0)),        # x
            pl.BlockSpec((hidden, 5 * hidden), lambda i: (0, 0)),    # w_fused
            pl.BlockSpec((hidden, hidden), lambda i: (0, 0)),        # wo_t
            pl.BlockSpec((tokens, hidden), lambda i: (0, 0)),        # cos
            pl.BlockSpec((tokens, hidden), lambda i: (0, 0)),        # sin
            pl.BlockSpec((tokens, tokens), lambda i: (0, 0)),        # mask
        ],
        out_specs=pl.BlockSpec((tokens, hidden), lambda i: (0, 0)),
        compiler_params=pltpu.CompilerParams(
            dimension_semantics=("arbitrary",)),
    )(x2, w_fused, wo_t, cos_f, sin_f, mask_bd)

    return out2.reshape(bsz, q_len, hidden)


# --------------------------- glue / references ------------------------------
def rope_tables(seq_len, dim, base=10000.0):
    """LlamaRotaryEmbedding tables for position_ids = arange(seq_len)."""
    inv_freq = 1.0 / (base ** (jnp.arange(0, dim, 2, dtype=jnp.float32) / dim))
    t = jnp.arange(seq_len, dtype=jnp.float32)
    freqs = jnp.outer(t, inv_freq)                      # (S, dim/2)
    emb = jnp.concatenate([freqs, freqs], axis=-1)      # (S, dim)
    return jnp.cos(emb), jnp.sin(emb)


def reference_attention(x, wq, wk, wv, wo, cos, sin, mask):
    """Pure-JAX replica of the PyTorch forward (eval mode)."""
    bsz, q_len, _ = x.shape

    def proj(w):
        y = jnp.einsum("bsh,oh->bso", x, w)
        return y.reshape(bsz, q_len, NH, HD).transpose(0, 2, 1, 3)  # (B,NH,S,HD)

    q, k, v = proj(wq), proj(wk), proj(wv)
    c = cos[None, None]
    s = sin[None, None]
    q = q * c + _rotate_half(q) * s
    k = k * c + _rotate_half(k) * s
    attn = jnp.einsum("bhqd,bhkd->bhqk", q, k) / math.sqrt(HD)
    attn = attn + mask[:, None]
    attn = jnp.maximum(attn, F32_MIN)
    attn = jax.nn.softmax(attn.astype(jnp.float32), axis=-1).astype(x.dtype)
    out = jnp.einsum("bhqk,bhkd->bhqd", attn, v)
    out = out.transpose(0, 2, 1, 3).reshape(bsz, q_len, H)
    return jnp.einsum("bsh,oh->bso", out, wo)


if __name__ == "__main__":
    key = jax.random.PRNGKey(0)
    kx, kq, kk, kv, ko = jax.random.split(key, 5)

    x = jax.random.normal(kx, (B, S, H), dtype=jnp.float32)
    wq = 0.02 * jax.random.normal(kq, (H, H), dtype=jnp.float32)
    wk = 0.02 * jax.random.normal(kk, (H, H), dtype=jnp.float32)
    wv = 0.02 * jax.random.normal(kv, (H, H), dtype=jnp.float32)
    wo = 0.02 * jax.random.normal(ko, (H, H), dtype=jnp.float32)

    cos, sin = rope_tables(S, HD)

    # causal additive attention mask, torch shape (B, 1, S, S) squeezed to (B, S, S)
    i = jnp.arange(S)[:, None]
    j = jnp.arange(S)[None, :]
    causal = jnp.where(j <= i, 0.0, F32_MIN).astype(jnp.float32)
    mask = jnp.broadcast_to(causal, (B, S, S))

    out = softmask_llama_attention(x, wq, wk, wv, wo, cos, sin, mask)
    out = jax.block_until_ready(out)

    ref = reference_attention(x, wq, wk, wv, wo, cos, sin, mask)
    np.testing.assert_allclose(np.asarray(out), np.asarray(ref),
                               rtol=1e-5, atol=1e-5)
    print("KERNEL_OK")
</pallas_src>

<mosaic_0001>
module attributes {stable_mosaic.version = 11 : i64} {
  func.func @attention_kernel(%arg0: i32, %arg1: memref<16x32xf32, #tpu.memory_space<vmem>>, %arg2: memref<32x160xf32, #tpu.memory_space<vmem>>, %arg3: memref<32x32xf32, #tpu.memory_space<vmem>>, %arg4: memref<16x32xf32, #tpu.memory_space<vmem>>, %arg5: memref<16x32xf32, #tpu.memory_space<vmem>>, %arg6: memref<16x16xf32, #tpu.memory_space<vmem>>, %arg7: memref<16x32xf32, #tpu.memory_space<vmem>>) attributes {dimension_semantics = [#tpu.dimension_semantics<arbitrary>], iteration_bounds = array<i64: 1>, scalar_prefetch = 0 : i64, scratch_operands = 0 : i64, tpu.core_type = #tpu.core_type<tc>, window_params = [{pipeline_mode = #tpu.pipeline_mode<synchronous>, transform_indices = @transform_0, window_bounds = array<i64: 16, 32>}, {pipeline_mode = #tpu.pipeline_mode<synchronous>, transform_indices = @transform_1, window_bounds = array<i64: 32, 160>}, {pipeline_mode = #tpu.pipeline_mode<synchronous>, transform_indices = @transform_2, window_bounds = array<i64: 32, 32>}, {pipeline_mode = #tpu.pipeline_mode<synchronous>, transform_indices = @transform_3, window_bounds = array<i64: 16, 32>}, {pipeline_mode = #tpu.pipeline_mode<synchronous>, transform_indices = @transform_4, window_bounds = array<i64: 16, 32>}, {pipeline_mode = #tpu.pipeline_mode<synchronous>, transform_indices = @transform_5, window_bounds = array<i64: 16, 16>}, {pipeline_mode = #tpu.pipeline_mode<synchronous>, transform_indices = @transform_6, window_bounds = array<i64: 16, 32>}]} {
    %c0 = arith.constant 0 : index
    %c0_0 = arith.constant 0 : index
    %0 = vector.load %arg1[%c0, %c0_0] : memref<16x32xf32, #tpu.memory_space<vmem>>, vector<16x32xf32>
    %c0_1 = arith.constant 0 : index
    %c0_2 = arith.constant 0 : index
    %1 = vector.load %arg2[%c0_1, %c0_2] : memref<32x160xf32, #tpu.memory_space<vmem>>, vector<32x160xf32>
    %c0_3 = arith.constant 0 : index
    %c0_4 = arith.constant 0 : index
    %2 = vector.load %arg3[%c0_3, %c0_4] : memref<32x32xf32, #tpu.memory_space<vmem>>, vector<32x32xf32>
    %c0_5 = arith.constant 0 : index
    %c0_6 = arith.constant 0 : index
    %3 = vector.load %arg4[%c0_5, %c0_6] : memref<16x32xf32, #tpu.memory_space<vmem>>, vector<16x32xf32>
    %c0_7 = arith.constant 0 : index
    %c0_8 = arith.constant 0 : index
    %4 = vector.load %arg5[%c0_7, %c0_8] : memref<16x32xf32, #tpu.memory_space<vmem>>, vector<16x32xf32>
    %c0_9 = arith.constant 0 : index
    %c0_10 = arith.constant 0 : index
    %5 = vector.load %arg6[%c0_9, %c0_10] : memref<16x16xf32, #tpu.memory_space<vmem>>, vector<16x16xf32>
    %cst = arith.constant dense<0.000000e+00> : vector<16x160xf32>
    %6 = tpu.matmul %0, %1, %cst {dimension_numbers = #tpu.dot_dimension_numbers<[1], [0], [0], [1], [0, 0, 1, 1], [], []>} : vector<16x32xf32>, vector<32x160xf32>, vector<16x160xf32> -> vector<16x160xf32>
    %7 = vector.extract_strided_slice %6 {offsets = [0, 0], sizes = [16, 32], strides = [1, 1]} : vector<16x160xf32> to vector<16x32xf32>
    %8 = arith.mulf %7, %3 : vector<16x32xf32>
    %9 = vector.extract_strided_slice %6 {offsets = [0, 32], sizes = [16, 32], strides = [1, 1]} : vector<16x160xf32> to vector<16x32xf32>
    %10 = arith.mulf %9, %4 : vector<16x32xf32>
    %11 = arith.addf %8, %10 : vector<16x32xf32>
    %12 = vector.extract_strided_slice %6 {offsets = [0, 64], sizes = [16, 32], strides = [1, 1]} : vector<16x160xf32> to vector<16x32xf32>
    %13 = arith.mulf %12, %3 : vector<16x32xf32>
    %14 = vector.extract_strided_slice %6 {offsets = [0, 96], sizes = [16, 32], strides = [1, 1]} : vector<16x160xf32> to vector<16x32xf32>
    %15 = arith.mulf %14, %4 : vector<16x32xf32>
    %16 = arith.addf %13, %15 : vector<16x32xf32>
    %17 = vector.extract_strided_slice %6 {offsets = [0, 128], sizes = [16, 32], strides = [1, 1]} : vector<16x160xf32> to vector<16x32xf32>
    %cst_11 = arith.constant 0.000000e+00 : f32
    %18 = vector.broadcast %cst_11 : f32 to vector<16x32xf32>
    %19 = vector.extract_strided_slice %11 {offsets = [0, 0], sizes = [16, 8], strides = [1, 1]} : vector<16x32xf32> to vector<16x8xf32>
    %20 = vector.extract_strided_slice %16 {offsets = [0, 0], sizes = [16, 8], strides = [1, 1]} : vector<16x32xf32> to vector<16x8xf32>
    %21 = vector.extract_strided_slice %17 {offsets = [0, 0], sizes = [16, 8], strides = [1, 1]} : vector<16x32xf32> to vector<16x8xf32>
    "tpu.trace_start"() <{level = 10 : i32, message = "qd,kd->qk"}> : () -> ()
    %cst_12 = arith.constant dense<0.000000e+00> : vector<16x16xf32>
    %22 = tpu.matmul %19, %20, %cst_12 {dimension_numbers = #tpu.dot_dimension_numbers<[1], [1], [0], [0], [0, 0, 1, 0], [], []>} : vector<16x8xf32>, vector<16x8xf32>, vector<16x16xf32> -> vector<16x16xf32>
    "tpu.trace_stop"() : () -> ()
    %23 = arith.addf %22, %5 : vector<16x16xf32>
    %cst_13 = arith.constant -3.40282347E+38 : f32
    %24 = vector.broadcast %cst_13 : f32 to vector<16x16xf32>
    %25 = arith.maximumf %23, %24 : vector<16x16xf32>
    %cst_14 = arith.constant dense<0xFF800000> : vector<16xf32>
    %26 = vector.multi_reduction <maximumf>, %25, %cst_14 [1] : vector<16x16xf32> to vector<16xf32>
    %27 = vector.shape_cast %26 : vector<16xf32> to vector<16x1xf32>
    %28 = vector.broadcast %27 : vector<16x1xf32> to vector<16x16xf32>
    %29 = arith.subf %25, %28 : vector<16x16xf32>
    %30 = math.exp %29 : vector<16x16xf32>
    %cst_15 = arith.constant dense<0.000000e+00> : vector<16xf32>
    %31 = vector.multi_reduction <add>, %30, %cst_15 [1] : vector<16x16xf32> to vector<16xf32>
    %32 = vector.shape_cast %31 : vector<16xf32> to vector<16x1xf32>
    %33 = vector.broadcast %32 : vector<16x1xf32> to vector<16x16xf32>
    %34 = arith.divf %30, %33 : vector<16x16xf32>
    %cst_16 = arith.constant dense<0.000000e+00> : vector<16x8xf32>
    %35 = tpu.matmul %34, %21, %cst_16 {dimension_numbers = #tpu.dot_dimension_numbers<[1], [0], [0], [1], [0, 0, 1, 1], [], []>} : vector<16x16xf32>, vector<16x8xf32>, vector<16x8xf32> -> vector<16x8xf32>
    %36 = vector.extract_strided_slice %2 {offsets = [0, 0], sizes = [8, 32], strides = [1, 1]} : vector<32x32xf32> to vector<8x32xf32>
    %cst_17 = arith.constant dense<0.000000e+00> : vector<16x32xf32>
    %37 = tpu.matmul %35, %36, %cst_17 {dimension_numbers = #tpu.dot_dimension_numbers<[1], [0], [0], [1], [0, 0, 1, 1], [], []>} : vector<16x8xf32>, vector<8x32xf32>, vector<16x32xf32> -> vector<16x32xf32>
    %38 = arith.addf %18, %37 : vector<16x32xf32>
    %39 = vector.extract_strided_slice %11 {offsets = [0, 8], sizes = [16, 8], strides = [1, 1]} : vector<16x32xf32> to vector<16x8xf32>
    %40 = vector.extract_strided_slice %16 {offsets = [0, 8], sizes = [16, 8], strides = [1, 1]} : vector<16x32xf32> to vector<16x8xf32>
    %41 = vector.extract_strided_slice %17 {offsets = [0, 8], sizes = [16, 8], strides = [1, 1]} : vector<16x32xf32> to vector<16x8xf32>
    "tpu.trace_start"() <{level = 10 : i32, message = "qd,kd->qk"}> : () -> ()
    %cst_18 = arith.constant dense<0.000000e+00> : vector<16x16xf32>
    %42 = tpu.matmul %39, %40, %cst_18 {dimension_numbers = #tpu.dot_dimension_numbers<[1], [1], [0], [0], [0, 0, 1, 0], [], []>} : vector<16x8xf32>, vector<16x8xf32>, vector<16x16xf32> -> vector<16x16xf32>
    "tpu.trace_stop"() : () -> ()
    %43 = arith.addf %42, %5 : vector<16x16xf32>
    %cst_19 = arith.constant -3.40282347E+38 : f32
    %44 = vector.broadcast %cst_19 : f32 to vector<16x16xf32>
    %45 = arith.maximumf %43, %44 : vector<16x16xf32>
    %cst_20 = arith.constant dense<0xFF800000> : vector<16xf32>
    %46 = vector.multi_reduction <maximumf>, %45, %cst_20 [1] : vector<16x16xf32> to vector<16xf32>
    %47 = vector.shape_cast %46 : vector<16xf32> to vector<16x1xf32>
    %48 = vector.broadcast %47 : vector<16x1xf32> to vector<16x16xf32>
    %49 = arith.subf %45, %48 : vector<16x16xf32>
    %50 = math.exp %49 : vector<16x16xf32>
    %cst_21 = arith.constant dense<0.000000e+00> : vector<16xf32>
    %51 = vector.multi_reduction <add>, %50, %cst_21 [1] : vector<16x16xf32> to vector<16xf32>
    %52 = vector.shape_cast %51 : vector<16xf32> to vector<16x1xf32>
    %53 = vector.broadcast %52 : vector<16x1xf32> to vector<16x16xf32>
    %54 = arith.divf %50, %53 : vector<16x16xf32>
    %cst_22 = arith.constant dense<0.000000e+00> : vector<16x8xf32>
    %55 = tpu.matmul %54, %41, %cst_22 {dimension_numbers = #tpu.dot_dimension_numbers<[1], [0], [0], [1], [0, 0, 1, 1], [], []>} : vector<16x16xf32>, vector<16x8xf32>, vector<16x8xf32> -> vector<16x8xf32>
    %56 = vector.extract_strided_slice %2 {offsets = [8, 0], sizes = [8, 32], strides = [1, 1]} : vector<32x32xf32> to vector<8x32xf32>
    %cst_23 = arith.constant dense<0.000000e+00> : vector<16x32xf32>
    %57 = tpu.matmul %55, %56, %cst_23 {dimension_numbers = #tpu.dot_dimension_numbers<[1], [0], [0], [1], [0, 0, 1, 1], [], []>} : vector<16x8xf32>, vector<8x32xf32>, vector<16x32xf32> -> vector<16x32xf32>
    %58 = arith.addf %38, %57 : vector<16x32xf32>
    %59 = vector.extract_strided_slice %11 {offsets = [0, 16], sizes = [16, 8], strides = [1, 1]} : vector<16x32xf32> to vector<16x8xf32>
    %60 = vector.extract_strided_slice %16 {offsets = [0, 16], sizes = [16, 8], strides = [1, 1]} : vector<16x32xf32> to vector<16x8xf32>
    %61 = vector.extract_strided_slice %17 {offsets = [0, 16], sizes = [16, 8], strides = [1, 1]} : vector<16x32xf32> to vector<16x8xf32>
    "tpu.trace_start"() <{level = 10 : i32, message = "qd,kd->qk"}> : () -> ()
    %cst_24 = arith.constant dense<0.000000e+00> : vector<16x16xf32>
    %62 = tpu.matmul %59, %60, %cst_24 {dimension_numbers = #tpu.dot_dimension_numbers<[1], [1], [0], [0], [0, 0, 1, 0], [], []>} : vector<16x8xf32>, vector<16x8xf32>, vector<16x16xf32> -> vector<16x16xf32>
    "tpu.trace_stop"() : () -> ()
    %63 = arith.addf %62, %5 : vector<16x16xf32>
    %cst_25 = arith.constant -3.40282347E+38 : f32
    %64 = vector.broadcast %cst_25 : f32 to vector<16x16xf32>
    %65 = arith.maximumf %63, %64 : vector<16x16xf32>
    %cst_26 = arith.constant dense<0xFF800000> : vector<16xf32>
    %66 = vector.multi_reduction <maximumf>, %65, %cst_26 [1] : vector<16x16xf32> to vector<16xf32>
    %67 = vector.shape_cast %66 : vector<16xf32> to vector<16x1xf32>
    %68 = vector.broadcast %67 : vector<16x1xf32> to vector<16x16xf32>
    %69 = arith.subf %65, %68 : vector<16x16xf32>
    %70 = math.exp %69 : vector<16x16xf32>
    %cst_27 = arith.constant dense<0.000000e+00> : vector<16xf32>
    %71 = vector.multi_reduction <add>, %70, %cst_27 [1] : vector<16x16xf32> to vector<16xf32>
    %72 = vector.shape_cast %71 : vector<16xf32> to vector<16x1xf32>
    %73 = vector.broadcast %72 : vector<16x1xf32> to vector<16x16xf32>
    %74 = arith.divf %70, %73 : vector<16x16xf32>
    %cst_28 = arith.constant dense<0.000000e+00> : vector<16x8xf32>
    %75 = tpu.matmul %74, %61, %cst_28 {dimension_numbers = #tpu.dot_dimension_numbers<[1], [0], [0], [1], [0, 0, 1, 1], [], []>} : vector<16x16xf32>, vector<16x8xf32>, vector<16x8xf32> -> vector<16x8xf32>
    %76 = vector.extract_strided_slice %2 {offsets = [16, 0], sizes = [8, 32], strides = [1, 1]} : vector<32x32xf32> to vector<8x32xf32>
    %cst_29 = arith.constant dense<0.000000e+00> : vector<16x32xf32>
    %77 = tpu.matmul %75, %76, %cst_29 {dimension_numbers = #tpu.dot_dimension_numbers<[1], [0], [0], [1], [0, 0, 1, 1], [], []>} : vector<16x8xf32>, vector<8x32xf32>, vector<16x32xf32> -> vector<16x32xf32>
    %78 = arith.addf %58, %77 : vector<16x32xf32>
    %79 = vector.extract_strided_slice %11 {offsets = [0, 24], sizes = [16, 8], strides = [1, 1]} : vector<16x32xf32> to vector<16x8xf32>
    %80 = vector.extract_strided_slice %16 {offsets = [0, 24], sizes = [16, 8], strides = [1, 1]} : vector<16x32xf32> to vector<16x8xf32>
    %81 = vector.extract_strided_slice %17 {offsets = [0, 24], sizes = [16, 8], strides = [1, 1]} : vector<16x32xf32> to vector<16x8xf32>
    "tpu.trace_start"() <{level = 10 : i32, message = "qd,kd->qk"}> : () -> ()
    %cst_30 = arith.constant dense<0.000000e+00> : vector<16x16xf32>
    %82 = tpu.matmul %79, %80, %cst_30 {dimension_numbers = #tpu.dot_dimension_numbers<[1], [1], [0], [0], [0, 0, 1, 0], [], []>} : vector<16x8xf32>, vector<16x8xf32>, vector<16x16xf32> -> vector<16x16xf32>
    "tpu.trace_stop"() : () -> ()
    %83 = arith.addf %82, %5 : vector<16x16xf32>
    %cst_31 = arith.constant -3.40282347E+38 : f32
    %84 = vector.broadcast %cst_31 : f32 to vector<16x16xf32>
    %85 = arith.maximumf %83, %84 : vector<16x16xf32>
    %cst_32 = arith.constant dense<0xFF800000> : vector<16xf32>
    %86 = vector.multi_reduction <maximumf>, %85, %cst_32 [1] : vector<16x16xf32> to vector<16xf32>
    %87 = vector.shape_cast %86 : vector<16xf32> to vector<16x1xf32>
    %88 = vector.broadcast %87 : vector<16x1xf32> to vector<16x16xf32>
    %89 = arith.subf %85, %88 : vector<16x16xf32>
    %90 = math.exp %89 : vector<16x16xf32>
    %cst_33 = arith.constant dense<0.000000e+00> : vector<16xf32>
    %91 = vector.multi_reduction <add>, %90, %cst_33 [1] : vector<16x16xf32> to vector<16xf32>
    %92 = vector.shape_cast %91 : vector<16xf32> to vector<16x1xf32>
    %93 = vector.broadcast %92 : vector<16x1xf32> to vector<16x16xf32>
    %94 = arith.divf %90, %93 : vector<16x16xf32>
    %cst_34 = arith.constant dense<0.000000e+00> : vector<16x8xf32>
    %95 = tpu.matmul %94, %81, %cst_34 {dimension_numbers = #tpu.dot_dimension_numbers<[1], [0], [0], [1], [0, 0, 1, 1], [], []>} : vector<16x16xf32>, vector<16x8xf32>, vector<16x8xf32> -> vector<16x8xf32>
    %96 = vector.extract_strided_slice %2 {offsets = [24, 0], sizes = [8, 32], strides = [1, 1]} : vector<32x32xf32> to vector<8x32xf32>
    %cst_35 = arith.constant dense<0.000000e+00> : vector<16x32xf32>
    %97 = tpu.matmul %95, %96, %cst_35 {dimension_numbers = #tpu.dot_dimension_numbers<[1], [0], [0], [1], [0, 0, 1, 1], [], []>} : vector<16x8xf32>, vector<8x32xf32>, vector<16x32xf32> -> vector<16x32xf32>
    %98 = arith.addf %78, %97 : vector<16x32xf32>
    %c0_36 = arith.constant 0 : index
    %c0_37 = arith.constant 0 : index
    %99 = vector.load %arg7[%c0_36, %c0_37] : memref<16x32xf32, #tpu.memory_space<vmem>>, vector<16x32xf32>
    tpu.vector_store %arg7[%c0_36, %c0_37], %98 {strides = array<i32>} : memref<16x32xf32, #tpu.memory_space<vmem>>, vector<16x32xf32>,
    return
  }
  func.func @transform_0(%arg0: i32) -> (i32, i32) {
    %c0_i32 = arith.constant 0 : i32
    %c0_i32_0 = arith.constant 0 : i32
    %c0_i32_1 = arith.constant 0 : i32
    return %c0_i32, %c0_i32_0 : i32, i32
  }
  func.func @transform_1(%arg0: i32) -> (i32, i32) {
    %c0_i32 = arith.constant 0 : i32
    %c0_i32_0 = arith.constant 0 : i32
    %c0_i32_1 = arith.constant 0 : i32
    return %c0_i32, %c0_i32_0 : i32, i32
  }
  func.func @transform_2(%arg0: i32) -> (i32, i32) {
    %c0_i32 = arith.constant 0 : i32
    %c0_i32_0 = arith.constant 0 : i32
    %c0_i32_1 = arith.constant 0 : i32
    return %c0_i32, %c0_i32_0 : i32, i32
  }
  func.func @transform_3(%arg0: i32) -> (i32, i32) {
    %c0_i32 = arith.constant 0 : i32
    %c0_i32_0 = arith.constant 0 : i32
    %c0_i32_1 = arith.constant 0 : i32
    return %c0_i32, %c0_i32_0 : i32, i32
  }
  func.func @transform_4(%arg0: i32) -> (i32, i32) {
    %c0_i32 = arith.constant 0 : i32
    %c0_i32_0 = arith.constant 0 : i32
    %c0_i32_1 = arith.constant 0 : i32
    return %c0_i32, %c0_i32_0 : i32, i32
  }
  func.func @transform_5(%arg0: i32) -> (i32, i32) {
    %c0_i32 = arith.constant 0 : i32
    %c0_i32_0 = arith.constant 0 : i32
    %c0_i32_1 = arith.constant 0 : i32
    return %c0_i32, %c0_i32_0 : i32, i32
  }
  func.func @transform_6(%arg0: i32) -> (i32, i32) {
    %c0_i32 = arith.constant 0 : i32
    %c0_i32_0 = arith.constant 0 : i32
    %c0_i32_1 = arith.constant 0 : i32
    return %c0_i32, %c0_i32_0 : i32, i32
  }
}

</mosaic_0001>

<llo_original>
// kernel: tpu_custom_call.1
$region0: #{tpu_custom_call.1}
  #allocation0 [shape = 'u32[]', space=smem, size = 0x4, offset = 0x4, fixed_abs, tag = 'smem constant byte address 0x4 - core index']
  #allocation1 [shape = 'u32[72,128]{1,0:T(1,128)}', space=vmem, size = 0x9000, scoped, tag = 'internal scratch']
  %s0 = inlined_call_operand.hbm [shape: f32[16,32], index: 0, kind: input, shape index: {}]
  %s1 = inlined_call_operand.hbm [shape: f32[32,160], index: 1, kind: input, shape index: {}]
  %s2 = inlined_call_operand.hbm [shape: f32[32,32], index: 2, kind: input, shape index: {}]
  %s3 = inlined_call_operand.hbm [shape: f32[16,32], index: 3, kind: input, shape index: {}]
  %s4 = inlined_call_operand.hbm [shape: f32[16,32], index: 4, kind: input, shape index: {}]
  %s5 = inlined_call_operand.hbm [shape: f32[16,16], index: 5, kind: input, shape index: {}]
  %s6 = inlined_call_operand.hbm [shape: f32[16,32], index: 6, kind: output, shape index: {}]
  %s7 = sld [smem:[#allocation0]]
  $region58: #{tpu_custom_call.1} parent=0
    _
  %s9 = ssub.s32 1, %s7
  %s10 = scalar_select 0, %s9, %s7
  $region1: #{tpu_custom_call.1} parent=0
    #allocation2 [shape = 'u8[8192]{0}', space=vmem, size = 0x2000, scoped, tag = 'input window, operand 0, single buffered']
    #allocation3 [shape = 's32[1]{0}', space=sflag, size = 0x4, scoped, tag = 'scoped memory for tpu_custom_call.1']
    #allocation4 [shape = 's32[1]{0}', space=sflag, size = 0x4, scoped, tag = 'scoped memory for tpu_custom_call.1']
    #allocation5 [shape = 'u8[32768]{0}', space=vmem, size = 0x8000, scoped, tag = 'input window, operand 1, single buffered']
    #allocation6 [shape = 's32[1]{0}', space=sflag, size = 0x4, scoped, tag = 'scoped memory for tpu_custom_call.1']
    #allocation7 [shape = 'u8[16384]{0}', space=vmem, size = 0x4000, scoped, tag = 'input window, operand 2, single buffered']
    #allocation8 [shape = 'u8[8192]{0}', space=vmem, size = 0x2000, scoped, tag = 'input window, operand 3, single buffered']
    #allocation9 [shape = 's32[1]{0}', space=sflag, size = 0x4, scoped, tag = 'scoped memory for tpu_custom_call.1']
    #allocation10 [shape = 'u8[8192]{0}', space=vmem, size = 0x2000, scoped, tag = 'input window, operand 4, single buffered']
    #allocation11 [shape = 'u8[8192]{0}', space=vmem, size = 0x2000, scoped, tag = 'input window, operand 5, single buffered']
    #allocation12 [shape = 's32[1]{0}', space=sflag, size = 0x4, scoped, tag = 'scoped memory for tpu_custom_call.1']
    #allocation13 [shape = 'u8[8192]{0}', space=vmem, size = 0x2000, scoped, tag = 'output window, operand 0, single buffered']
    %11 = vsyncpa [#allocation3], 0
    %12 = vsyncpa [#allocation6], 0
    %13 = vsyncpa [#allocation9], 0
    %14 = vsyncpa [#allocation12], 0
    %15 = vsyncpa [#allocation4], 0
    // Predicated region
    $region2: #{tpu_custom_call.1} parent=1 // pred_check
      _
    $region3: #{tpu_custom_call.1} parent=1 // pred_check_branch
      %17 = sbr.rel (0) target = $region5
    $region4: #{tpu_custom_call.1} parent=1 // pred_region
      %19 = vsyncadd [#allocation3], 0
      %s20 = sshll.u32 %s0, 4
      %s21 = int_to_ptr.hbm [resolvable:$true] %s20
      %s22 = sshll.u32 [#allocation2], 4
      %s23 = int_to_ptr.vmem [resolvable:$true] %s22
      %28 = dma.hbm_to_vmem [thread:$0]  %s21, 256, %s23, [#allocation3], 128, 128, 8
    $region5: #{tpu_custom_call.1} parent=1 // pred_fallthru
      _
    // Predicated region
    $region6: #{tpu_custom_call.1} parent=1 // pred_check
      _
    $region7: #{tpu_custom_call.1} parent=1 // pred_check_branch
      %30 = sbr.rel (0) target = $region9
    $region8: #{tpu_custom_call.1} parent=1 // pred_region
      %32 = vsyncadd [#allocation6], 0
      %s33 = sshll.u32 %s1, 4
      %s34 = int_to_ptr.hbm [resolvable:$true] %s33
      %s35 = sshll.u32 [#allocation5], 4
      %s36 = int_to_ptr.vmem [resolvable:$true] %s35
      %41 = dma.hbm_to_vmem [thread:$0]  %s34, 1024, %s36, [#allocation6], 256, 256, 16
    $region9: #{tpu_custom_call.1} parent=1 // pred_fallthru
      _
    // Predicated region
    $region10: #{tpu_custom_call.1} parent=1 // pred_check
      _
    $region11: #{tpu_custom_call.1} parent=1 // pred_check_branch
      %43 = sbr.rel (0) target = $region13
    $region12: #{tpu_custom_call.1} parent=1 // pred_region
      %45 = vsyncadd [#allocation6], 0
      %s46 = sshll.u32 %s2, 4
      %s47 = int_to_ptr.hbm [resolvable:$true] %s46
      %s48 = sshll.u32 [#allocation7], 4
      %s49 = int_to_ptr.vmem [resolvable:$true] %s48
      %54 = dma.hbm_to_vmem [thread:$0]  %s47, 512, %s49, [#allocation6], 128, 128, 8
    $region13: #{tpu_custom_call.1} parent=1 // pred_fallthru
      _
    // Predicated region
    $region14: #{tpu_custom_call.1} parent=1 // pred_check
      _
    $region15: #{tpu_custom_call.1} parent=1 // pred_check_branch
      %56 = sbr.rel (0) target = $region17
    $region16: #{tpu_custom_call.1} parent=1 // pred_region
      %58 = vsyncadd [#allocation9], 0
      %s59 = sshll.u32 %s3, 4
      %s60 = int_to_ptr.hbm [resolvable:$true] %s59
      %s61 = sshll.u32 [#allocation8], 4
      %s62 = int_to_ptr.vmem [resolvable:$true] %s61
      %67 = dma.hbm_to_vmem [thread:$0]  %s60, 256, %s62, [#allocation9], 128, 128, 8
    $region17: #{tpu_custom_call.1} parent=1 // pred_fallthru
      _
    // Predicated region
    $region18: #{tpu_custom_call.1} parent=1 // pred_check
      _
    $region19: #{tpu_custom_call.1} parent=1 // pred_check_branch
      %69 = sbr.rel (0) target = $region21
    $region20: #{tpu_custom_call.1} parent=1 // pred_region
      %71 = vsyncadd [#allocation9], 0
      %s72 = sshll.u32 %s4, 4
      %s73 = int_to_ptr.hbm [resolvable:$true] %s72
      %s74 = sshll.u32 [#allocation10], 4
      %s75 = int_to_ptr.vmem [resolvable:$true] %s74
      %80 = dma.hbm_to_vmem [thread:$0]  %s73, 256, %s75, [#allocation9], 128, 128, 8
    $region21: #{tpu_custom_call.1} parent=1 // pred_fallthru
      _
    // Predicated region
    $region22: #{tpu_custom_call.1} parent=1 // pred_check
      _
    $region23: #{tpu_custom_call.1} parent=1 // pred_check_branch
      %82 = sbr.rel (0) target = $region25
    $region24: #{tpu_custom_call.1} parent=1 // pred_region
      %84 = vsyncadd [#allocation12], 0
      %s85 = sshll.u32 %s5, 4
      %s86 = int_to_ptr.hbm [resolvable:$true] %s85
      %s87 = sshll.u32 [#allocation11], 4
      %s88 = int_to_ptr.vmem [resolvable:$true] %s87
      %93 = dma.hbm_to_vmem [thread:$0]  %s86, 256, %s88, [#allocation12], 128, 128, 8
    $region25: #{tpu_custom_call.1} parent=1 // pred_fallthru
      _
    // Predicated region
    $region26: #{tpu_custom_call.1} parent=1 // pred_check
      _
    $region27: #{tpu_custom_call.1} parent=1 // pred_check_branch
      %95 = sbr.rel (0) target = $region29
    $region28: #{tpu_custom_call.1} parent=1 // pred_region
      %97 = dma.done [#allocation3], 256
    $region29: #{tpu_custom_call.1} parent=1 // pred_fallthru
      _
    // Predicated region
    $region30: #{tpu_custom_call.1} parent=1 // pred_check
      _
    $region31: #{tpu_custom_call.1} parent=1 // pred_check_branch
      %99 = sbr.rel (0) target = $region33
    $region32: #{tpu_custom_call.1} parent=1 // pred_region
      %101 = dma.done [#allocation6], 1024
    $region33: #{tpu_custom_call.1} parent=1 // pred_fallthru
      _
    // Predicated region
    $region34: #{tpu_custom_call.1} parent=1 // pred_check
      _
    $region35: #{tpu_custom_call.1} parent=1 // pred_check_branch
      %103 = sbr.rel (0) target = $region37
    $region36: #{tpu_custom_call.1} parent=1 // pred_region
      %105 = dma.done [#allocation6], 512
    $region37: #{tpu_custom_call.1} parent=1 // pred_fallthru
      _
    // Predicated region
    $region38: #{tpu_custom_call.1} parent=1 // pred_check
      _
    $region39: #{tpu_custom_call.1} parent=1 // pred_check_branch
      %107 = sbr.rel (0) target = $region41
    $region40: #{tpu_custom_call.1} parent=1 // pred_region
      %109 = dma.done [#allocation9], 256
    $region41: #{tpu_custom_call.1} parent=1 // pred_fallthru
      _
    // Predicated region
    $region42: #{tpu_custom_call.1} parent=1 // pred_check
      _
    $region43: #{tpu_custom_call.1} parent=1 // pred_check_branch
      %111 = sbr.rel (0) target = $region45
    $region44: #{tpu_custom_call.1} parent=1 // pred_region
      %113 = dma.done [#allocation9], 256
    $region45: #{tpu_custom_call.1} parent=1 // pred_fallthru
      _
    // Predicated region
    $region46: #{tpu_custom_call.1} parent=1 // pred_check
      _
    $region47: #{tpu_custom_call.1} parent=1 // pred_check_branch
      %115 = sbr.rel (0) target = $region49
    $region48: #{tpu_custom_call.1} parent=1 // pred_region
      %117 = dma.done [#allocation12], 256
    $region49: #{tpu_custom_call.1} parent=1 // pred_fallthru
      _
    %v118 = vld [vmem:[#allocation2] sm:$0xff]
    %v119 = vld [vmem:[#allocation2 + $0x8] sm:$0xff]
    %v120 = vld [vmem:[#allocation5] sm:$0xff]
    %v121 = vld [vmem:[#allocation5 + $0x8] sm:$0xff]
    %v122 = vld [vmem:[#allocation5 + $0x10] sm:$0xff]
    %v123 = vld [vmem:[#allocation5 + $0x18] sm:$0xff]
    %v124 = vld [vmem:[#allocation5 + $0x20] sm:$0xff]
    %v125 = vld [vmem:[#allocation5 + $0x28] sm:$0xff]
    %v126 = vld [vmem:[#allocation5 + $0x30] sm:$0xff]
    %v127 = vld [vmem:[#allocation5 + $0x38] sm:$0xff]
    %v128 = vld [vmem:[#allocation7] sm:$0xff]
    %v129 = vld [vmem:[#allocation7 + $0x8] sm:$0xff]
    %v130 = vld [vmem:[#allocation7 + $0x10] sm:$0xff]
    %v131 = vld [vmem:[#allocation7 + $0x18] sm:$0xff]
    %v132 = vld [vmem:[#allocation8] sm:$0xff]
    %v133 = vld [vmem:[#allocation8 + $0x8] sm:$0xff]
    %v134 = vld [vmem:[#allocation10] sm:$0xff]
    %v135 = vld [vmem:[#allocation10 + $0x8] sm:$0xff]
    %v136 = vld [vmem:[#allocation11] sm:$0xff]
    %v137 = vld [vmem:[#allocation11 + $0x8] sm:$0xff]
    %vm138 = vcmask 261120
    %v140 = vsel %vm138, %v118, 0
    %v143 = vsel %vm138, %v119, 0
    %145 = vmatpush.msra.mxu0 0.0
    %146 = vmatpush.msra.mxu0 0.0
    %147 = vmatpush.msra.mxu0 0.0
    %148 = vmatpush.msra.mxu0 0.0
    %149 = vmatpush.msra.mxu0 0.0
    %150 = vmatpush.msra.mxu0 0.0
    %151 = vmatpush.msra.mxu0 0.0
    %152 = vmatpush.msra.mxu0 0.0
    %153 = vmatpush.msra.mxu0 0.0
    %154 = vmatpush.msra.mxu0 0.0
    %155 = vmatpush.msra.mxu0 0.0
    %156 = vmatpush.msra.mxu0 0.0
    %157 = vmatpush.msra.mxu0 %v126
    %158 = vmatpush.msra.mxu0 %v124
    %159 = vmatpush.msra.mxu0 %v122
    %160 = vmatpush.msra.mxu0 %v120
    %161 = vmatmul.f32.gmra.mxu0 %v140
    %v162 = vpop.f32.mrf.mxu0
    %v163 = vadd.f32 0.0, %v162
    %164 = vmatmul.f32.gmra.mxu0 %v143
    %v165 = vpop.f32.mrf.mxu0
    %v166 = vadd.f32 0.0, %v165
    %167 = vdwg.mxu0
    %168 = vmatpush.msra.mxu0 0.0
    %169 = vmatpush.msra.mxu0 0.0
    %170 = vmatpush.msra.mxu0 0.0
    %171 = vmatpush.msra.mxu0 0.0
    %172 = vmatpush.msra.mxu0 0.0
    %173 = vmatpush.msra.mxu0 0.0
    %174 = vmatpush.msra.mxu0 0.0
    %175 = vmatpush.msra.mxu0 0.0
    %176 = vmatpush.msra.mxu0 0.0
    %177 = vmatpush.msra.mxu0 0.0
    %178 = vmatpush.msra.mxu0 0.0
    %179 = vmatpush.msra.mxu0 0.0
    %180 = vmatpush.msra.mxu0 %v127
    %181 = vmatpush.msra.mxu0 %v125
    %182 = vmatpush.msra.mxu0 %v123
    %183 = vmatpush.msra.mxu0 %v121
    %184 = vmatmul.f32.gmra.mxu0 %v140
    %v185 = vpop.f32.mrf.mxu0
    %v186 = vadd.f32 0.0, %v185
    %187 = vmatmul.f32.gmra.mxu0 %v143
    %v188 = vpop.f32.mrf.mxu0
    %v189 = vadd.f32 0.0, %v188
    %190 = vdwg.mxu0
    %v191 = vmul.f32 %v163, %v132
    %v192 = vmul.f32 %v166, %v133
    %195 = vrot.lane.b32.xlu0 %v134, 32
    %v196 = vpop.permute.xlu0 %195
    %197 = vrot.lane.b32.xlu0 %v135, 32
    %v198 = vpop.permute.xlu0 %197
    %v201 = vmul.f32 %v163, %v196
    %v202 = vmul.f32 %v166, %v198
    %205 = vrot.lane.b32.xlu0 %v201, 96
    %v206 = vpop.permute.xlu0 %205
    %207 = vrot.lane.b32.xlu0 %v202, 96
    %v208 = vpop.permute.xlu0 %207
    %v211 = vadd.f32 %v191, %v206
    %v212 = vadd.f32 %v192, %v208
    %215 = vrot.lane.b32.xlu0 %v132, 64
    %v216 = vpop.permute.xlu0 %215
    %217 = vrot.lane.b32.xlu0 %v133, 64
    %v218 = vpop.permute.xlu0 %217
    %v221 = vmul.f32 %v163, %v216
    %v222 = vmul.f32 %v166, %v218
    %223 = vrot.lane.b32.xlu0 %v134, 96
    %v224 = vpop.permute.xlu0 %223
    %225 = vrot.lane.b32.xlu0 %v135, 96
    %v226 = vpop.permute.xlu0 %225
    %v229 = vmul.f32 %v163, %v224
    %v230 = vmul.f32 %v166, %v226
    %233 = vrot.lane.b32.xlu0 %v229, 96
    %v234 = vpop.permute.xlu0 %233
    %235 = vrot.lane.b32.xlu0 %v230, 96
    %v236 = vpop.permute.xlu0 %235
    %v239 = vadd.f32 %v221, %v234
    %v240 = vadd.f32 %v222, %v236
    %243 = vrot.lane.b32.xlu0 %v239, 64
    %v244 = vpop.permute.xlu0 %243
    %245 = vrot.lane.b32.xlu0 %v240, 64
    %v246 = vpop.permute.xlu0 %245
    %vm247 = vcmask 64512
    %v249 = vsel %vm247, %v211, 0
    %v252 = vsel %vm247, %v212, 0
    %v254 = vsel %vm247, %v244, 0
    %v256 = vsel %vm247, %v246, 0
    %258 = vmatpush.xpose.msra.mxu0 0.0
    %259 = vmatpush.xpose.msra.mxu0 0.0
    %260 = vmatpush.xpose.msra.mxu0 0.0
    %261 = vmatpush.xpose.msra.mxu0 0.0
    %262 = vmatpush.xpose.msra.mxu0 0.0
    %263 = vmatpush.xpose.msra.mxu0 0.0
    %264 = vmatpush.xpose.msra.mxu0 0.0
    %265 = vmatpush.xpose.msra.mxu0 0.0
    %266 = vmatpush.xpose.msra.mxu0 0.0
    %267 = vmatpush.xpose.msra.mxu0 0.0
    %268 = vmatpush.xpose.msra.mxu0 0.0
    %269 = vmatpush.xpose.msra.mxu0 0.0
    %270 = vmatpush.xpose.msra.mxu0 0.0
    %271 = vmatpush.xpose.msra.mxu0 0.0
    %272 = vmatpush.xpose.msra.mxu0 %v256
    %273 = vmatpush.xpose.msra.mxu0 %v254
    %274 = vmatmul.f32.gmra.mxu0 %v249
    %v275 = vpop.f32.mrf.mxu0
    %v276 = vadd.f32 %v136, %v275
    %277 = vmatmul.f32.gmra.mxu0 %v252
    %v278 = vpop.f32.mrf.mxu0
    %v279 = vadd.f32 %v137, %v278
    %280 = vdwg.mxu0
    %v281 = vmax.f32 %v276, -3.4028235e+38
    %v282 = vmax.f32 %v279, -3.4028235e+38
    %vm283 = vcmask 130048
    %v284 = vsel %vm283, %v281, -inf
    %285 = vmax.xlane.f32.xlu0 %v284
    %v286 = vpop.xlane.xlu0 %285
    %v287 = vsel %vm283, %v282, -inf
    %288 = vmax.xlane.f32.xlu0 %v287
    %v289 = vpop.xlane.xlu0 %288
    %v290 = vsub.f32 %v281, %v286
    %v291 = vsub.f32 %v282, %v289
    %v292 = vmul.f32 %v290, 1.442695
    %v293 = vpow.pop %v292
    %v294 = vmul.f32 %v291, 1.442695
    %v295 = vpow.pop %v294
    %v296 = vsel %vm283, %v293, 0.0
    %297 = vadd.xlane.f32.xlu0 %v296
    %v298 = vpop.xlane.xlu0 %297
    %v299 = vsel %vm283, %v295, 0.0
    %300 = vadd.xlane.f32.xlu0 %v299
    %v301 = vpop.xlane.xlu0 %300
    %v302 = vrcp.pop %v298
    %v303 = vmul.f32 %v298, %v302
    %v304 = vsub.f32 1.0, %v303
    %v305 = vmul.f32 %v302, %v304
    %v306 = vadd.f32 %v302, %v305
    %vm307 = vweird.f32 %v298
    %vm308 = vweird.f32 %v302
    %vm309 = vmor %vm307, %vm308
    %v310 = vsel %vm309, %v302, %v306
    %v311 = vand.u32 2147483647, %v298
    %vm312 = vcmp.eq.f32.partialorder %v311, 8.507059e+37
    %v313 = vand.u32 %v298, 2147483648
    %v314 = vor.u32 1.1754944e-38, %v313
    %v315 = vsel %vm312, %v314, %v310
    %v316 = vmul.f32 %v293, %v315
    %v317 = vrcp.pop %v301
    %v318 = vmul.f32 %v301, %v317
    %v319 = vsub.f32 1.0, %v318
    %v320 = vmul.f32 %v317, %v319
    %v321 = vadd.f32 %v317, %v320
    %vm322 = vweird.f32 %v301
    %vm323 = vweird.f32 %v317
    %vm324 = vmor %vm322, %vm323
    %v325 = vsel %vm324, %v317, %v321
    %v326 = vand.u32 2147483647, %v301
    %vm327 = vcmp.eq.f32.partialorder %v326, 8.507059e+37
    %v328 = vand.u32 %v301, 2147483648
    %v329 = vor.u32 1.1754944e-38, %v328
    %v330 = vsel %vm327, %v329, %v325
    %v331 = vmul.f32 %v295, %v330
    %v333 = vsel %vm283, %v316, 0
    %v336 = vsel %vm283, %v331, 0
    %338 = vmatpush.msra.mxu0 0.0
    %339 = vmatpush.msra.mxu0 0.0
    %340 = vmatpush.msra.mxu0 0.0
    %341 = vmatpush.msra.mxu0 0.0
    %342 = vmatpush.msra.mxu0 0.0
    %343 = vmatpush.msra.mxu0 0.0
    %344 = vmatpush.msra.mxu0 0.0
    %345 = vmatpush.msra.mxu0 0.0
    %346 = vmatpush.msra.mxu0 0.0
    %347 = vmatpush.msra.mxu0 0.0
    %348 = vmatpush.msra.mxu0 0.0
    %349 = vmatpush.msra.mxu0 0.0
    %350 = vmatpush.msra.mxu0 0.0
    %351 = vmatpush.msra.mxu0 0.0
    %352 = vmatpush.msra.mxu0 %v189
    %353 = vmatpush.msra.mxu0 %v186
    %354 = vmatmul.f32.gmra.mxu0 %v333
    %v355 = vpop.f32.mrf.mxu0
    %v356 = vadd.f32 0.0, %v355
    %357 = vmatmul.f32.gmra.mxu0 %v336
    %v358 = vpop.f32.mrf.mxu0
    %v359 = vadd.f32 0.0, %v358
    %360 = vdwg.mxu0
    %361 = vrot.lane.b32.xlu0 %v211, 120
    %v362 = vpop.permute.xlu0 %361
    %363 = vrot.lane.b32.xlu0 %v212, 120
    %v364 = vpop.permute.xlu0 %363
    %365 = vrot.lane.b32.xlu0 %v239, 56
    %v366 = vpop.permute.xlu0 %365
    %367 = vrot.lane.b32.xlu0 %v240, 56
    %v368 = vpop.permute.xlu0 %367
    %v369 = vsel %vm247, %v362, 0
    %v371 = vsel %vm247, %v364, 0
    %v373 = vsel %vm247, %v366, 0
    %v375 = vsel %vm247, %v368, 0
    %377 = vmatpush.xpose.msra.mxu0 0.0
    %378 = vmatpush.xpose.msra.mxu0 0.0
    %379 = vmatpush.xpose.msra.mxu0 0.0
    %380 = vmatpush.xpose.msra.mxu0 0.0
    %381 = vmatpush.xpose.msra.mxu0 0.0
    %382 = vmatpush.xpose.msra.mxu0 0.0
    %383 = vmatpush.xpose.msra.mxu0 0.0
    %384 = vmatpush.xpose.msra.mxu0 0.0
    %385 = vmatpush.xpose.msra.mxu0 0.0
    %386 = vmatpush.xpose.msra.mxu0 0.0
    %387 = vmatpush.xpose.msra.mxu0 0.0
    %388 = vmatpush.xpose.msra.mxu0 0.0
    %389 = vmatpush.xpose.msra.mxu0 0.0
    %390 = vmatpush.xpose.msra.mxu0 0.0
    %391 = vmatpush.xpose.msra.mxu0 %v375
    %392 = vmatpush.xpose.msra.mxu0 %v373
    %393 = vmatmul.f32.gmra.mxu0 %v369
    %v394 = vpop.f32.mrf.mxu0
    %v395 = vadd.f32 %v136, %v394
    %396 = vmatmul.f32.gmra.mxu0 %v371
    %v397 = vpop.f32.mrf.mxu0
    %v398 = vadd.f32 %v137, %v397
    %399 = vdwg.mxu0
    %v400 = vmax.f32 %v395, -3.4028235e+38
    %v401 = vmax.f32 %v398, -3.4028235e+38
    %v402 = vsel %vm283, %v400, -inf
    %403 = vmax.xlane.f32.xlu0 %v402
    %v404 = vpop.xlane.xlu0 %403
    %v405 = vsel %vm283, %v401, -inf
    %406 = vmax.xlane.f32.xlu0 %v405
    %v407 = vpop.xlane.xlu0 %406
    %v408 = vsub.f32 %v400, %v404
    %v409 = vsub.f32 %v401, %v407
    %v410 = vmul.f32 %v408, 1.442695
    %v411 = vpow.pop %v410
    %v412 = vmul.f32 %v409, 1.442695
    %v413 = vpow.pop %v412
    %v414 = vsel %vm283, %v411, 0.0
    %415 = vadd.xlane.f32.xlu0 %v414
    %v416 = vpop.xlane.xlu0 %415
    %v417 = vsel %vm283, %v413, 0.0
    %418 = vadd.xlane.f32.xlu0 %v417
    %v419 = vpop.xlane.xlu0 %418
    %v420 = vrcp.pop %v416
    %v421 = vmul.f32 %v416, %v420
    %v422 = vsub.f32 1.0, %v421
    %v423 = vmul.f32 %v420, %v422
    %v424 = vadd.f32 %v420, %v423
    %vm425 = vweird.f32 %v416
    %vm426 = vweird.f32 %v420
    %vm427 = vmor %vm425, %vm426
    %v428 = vsel %vm427, %v420, %v424
    %v429 = vand.u32 2147483647, %v416
    %vm430 = vcmp.eq.f32.partialorder %v429, 8.507059e+37
    %v431 = vand.u32 %v416, 2147483648
    %v432 = vor.u32 1.1754944e-38, %v431
    %v433 = vsel %vm430, %v432, %v428
    %v434 = vmul.f32 %v411, %v433
    %v435 = vrcp.pop %v419
    %v436 = vmul.f32 %v419, %v435
    %v437 = vsub.f32 1.0, %v436
    %v438 = vmul.f32 %v435, %v437
    %v439 = vadd.f32 %v435, %v438
    %vm440 = vweird.f32 %v419
    %vm441 = vweird.f32 %v435
    %vm442 = vmor %vm440, %vm441
    %v443 = vsel %vm442, %v435, %v439
    %v444 = vand.u32 2147483647, %v419
    %vm445 = vcmp.eq.f32.partialorder %v444, 8.507059e+37
    %v446 = vand.u32 %v419, 2147483648
    %v447 = vor.u32 1.1754944e-38, %v446
    %v448 = vsel %vm445, %v447, %v443
    %v449 = vmul.f32 %v413, %v448
    %452 = vrot.lane.b32.xlu0 %v186, 120
    %v453 = vpop.permute.xlu0 %452
    %454 = vrot.lane.b32.xlu0 %v189, 120
    %v455 = vpop.permute.xlu0 %454
    %v459 = vsel %vm283, %v434, 0
    %v462 = vsel %vm283, %v449, 0
    %464 = vmatpush.msra.mxu0 0.0
    %465 = vmatpush.msra.mxu0 0.0
    %466 = vmatpush.msra.mxu0 0.0
    %467 = vmatpush.msra.mxu0 0.0
    %468 = vmatpush.msra.mxu0 0.0
    %469 = vmatpush.msra.mxu0 0.0
    %470 = vmatpush.msra.mxu0 0.0
    %471 = vmatpush.msra.mxu0 0.0
    %472 = vmatpush.msra.mxu0 0.0
    %473 = vmatpush.msra.mxu0 0.0
    %474 = vmatpush.msra.mxu0 0.0
    %475 = vmatpush.msra.mxu0 0.0
    %476 = vmatpush.msra.mxu0 0.0
    %477 = vmatpush.msra.mxu0 0.0
    %478 = vmatpush.msra.mxu0 %v455
    %479 = vmatpush.msra.mxu0 %v453
    %480 = vmatmul.f32.gmra.mxu0 %v459
    %v481 = vpop.f32.mrf.mxu0
    %v482 = vadd.f32 0.0, %v481
    %483 = vmatmul.f32.gmra.mxu0 %v462
    %v484 = vpop.f32.mrf.mxu0
    %v485 = vadd.f32 0.0, %v484
    %486 = vdwg.mxu0
    %v488 = vsel %vm247, %v482, 0
    %v491 = vsel %vm247, %v485, 0
    %493 = vmatpush.msra.mxu0 0.0
    %494 = vmatpush.msra.mxu0 0.0
    %495 = vmatpush.msra.mxu0 0.0
    %496 = vmatpush.msra.mxu0 0.0
    %497 = vmatpush.msra.mxu0 0.0
    %498 = vmatpush.msra.mxu0 0.0
    %499 = vmatpush.msra.mxu0 0.0
    %500 = vmatpush.msra.mxu0 0.0
    %501 = vmatpush.msra.mxu0 0.0
    %502 = vmatpush.msra.mxu0 0.0
    %503 = vmatpush.msra.mxu0 0.0
    %504 = vmatpush.msra.mxu0 0.0
    %505 = vmatpush.msra.mxu0 0.0
    %506 = vmatpush.msra.mxu0 0.0
    %507 = vmatpush.msra.mxu0 0.0
    %508 = vmatpush.msra.mxu0 %v129
    %509 = vmatmul.f32.gmra.mxu0 %v488
    %v510 = vpop.f32.mrf.mxu0
    %v511 = vadd.f32 0.0, %v510
    %512 = vmatmul.f32.gmra.mxu0 %v491
    %v513 = vpop.f32.mrf.mxu0
    %v514 = vadd.f32 0.0, %v513
    %515 = vdwg.mxu0
    %v517 = vsel %vm247, %v356, 0
    %v520 = vsel %vm247, %v359, 0
    %522 = vmatpush.msra.mxu0 0.0
    %523 = vmatpush.msra.mxu0 0.0
    %524 = vmatpush.msra.mxu0 0.0
    %525 = vmatpush.msra.mxu0 0.0
    %526 = vmatpush.msra.mxu0 0.0
    %527 = vmatpush.msra.mxu0 0.0
    %528 = vmatpush.msra.mxu0 0.0
    %529 = vmatpush.msra.mxu0 0.0
    %530 = vmatpush.msra.mxu0 0.0
    %531 = vmatpush.msra.mxu0 0.0
    %532 = vmatpush.msra.mxu0 0.0
    %533 = vmatpush.msra.mxu0 0.0
    %534 = vmatpush.msra.mxu0 0.0
    %535 = vmatpush.msra.mxu0 0.0
    %536 = vmatpush.msra.mxu0 0.0
    %537 = vmatpush.msra.mxu0 %v128
    %538 = vmatmul.f32.gmra.mxu0 %v517
    %v539 = vpop.f32.mrf.mxu0
    %v540 = vadd.f32 %v511, %v539
    %541 = vmatmul.f32.gmra.mxu0 %v520
    %v542 = vpop.f32.mrf.mxu0
    %v543 = vadd.f32 %v514, %v542
    %544 = vdwg.mxu0
    %545 = vrot.lane.b32.xlu0 %v211, 112
    %v546 = vpop.permute.xlu0 %545
    %547 = vrot.lane.b32.xlu0 %v212, 112
    %v548 = vpop.permute.xlu0 %547
    %549 = vrot.lane.b32.xlu0 %v239, 48
    %v550 = vpop.permute.xlu0 %549
    %551 = vrot.lane.b32.xlu0 %v240, 48
    %v552 = vpop.permute.xlu0 %551
    %v553 = vsel %vm247, %v546, 0
    %v555 = vsel %vm247, %v548, 0
    %v557 = vsel %vm247, %v550, 0
    %v559 = vsel %vm247, %v552, 0
    %561 = vmatpush.xpose.msra.mxu0 0.0
    %562 = vmatpush.xpose.msra.mxu0 0.0
    %563 = vmatpush.xpose.msra.mxu0 0.0
    %564 = vmatpush.xpose.msra.mxu0 0.0
    %565 = vmatpush.xpose.msra.mxu0 0.0
    %566 = vmatpush.xpose.msra.mxu0 0.0
    %567 = vmatpush.xpose.msra.mxu0 0.0
    %568 = vmatpush.xpose.msra.mxu0 0.0
    %569 = vmatpush.xpose.msra.mxu0 0.0
    %570 = vmatpush.xpose.msra.mxu0 0.0
    %571 = vmatpush.xpose.msra.mxu0 0.0
    %572 = vmatpush.xpose.msra.mxu0 0.0
    %573 = vmatpush.xpose.msra.mxu0 0.0
    %574 = vmatpush.xpose.msra.mxu0 0.0
    %575 = vmatpush.xpose.msra.mxu0 %v559
    %576 = vmatpush.xpose.msra.mxu0 %v557
    %577 = vmatmul.f32.gmra.mxu0 %v553
    %v578 = vpop.f32.mrf.mxu0
    %v579 = vadd.f32 %v136, %v578
    %580 = vmatmul.f32.gmra.mxu0 %v555
    %v581 = vpop.f32.mrf.mxu0
    %v582 = vadd.f32 %v137, %v581
    %583 = vdwg.mxu0
    %v584 = vmax.f32 %v579, -3.4028235e+38
    %v585 = vmax.f32 %v582, -3.4028235e+38
    %v586 = vsel %vm283, %v584, -inf
    %587 = vmax.xlane.f32.xlu0 %v586
    %v588 = vpop.xlane.xlu0 %587
    %v589 = vsel %vm283, %v585, -inf
    %590 = vmax.xlane.f32.xlu0 %v589
    %v591 = vpop.xlane.xlu0 %590
    %v592 = vsub.f32 %v584, %v588
    %v593 = vsub.f32 %v585, %v591
    %v594 = vmul.f32 %v592, 1.442695
    %v595 = vpow.pop %v594
    %v596 = vmul.f32 %v593, 1.442695
    %v597 = vpow.pop %v596
    %v598 = vsel %vm283, %v595, 0.0
    %599 = vadd.xlane.f32.xlu0 %v598
    %v600 = vpop.xlane.xlu0 %599
    %v601 = vsel %vm283, %v597, 0.0
    %602 = vadd.xlane.f32.xlu0 %v601
    %v603 = vpop.xlane.xlu0 %602
    %v604 = vrcp.pop %v600
    %v605 = vmul.f32 %v600, %v604
    %v606 = vsub.f32 1.0, %v605
    %v607 = vmul.f32 %v604, %v606
    %v608 = vadd.f32 %v604, %v607
    %vm609 = vweird.f32 %v600
    %vm610 = vweird.f32 %v604
    %vm611 = vmor %vm609, %vm610
    %v612 = vsel %vm611, %v604, %v608
    %v613 = vand.u32 2147483647, %v600
    %vm614 = vcmp.eq.f32.partialorder %v613, 8.507059e+37
    %v615 = vand.u32 %v600, 2147483648
    %v616 = vor.u32 1.1754944e-38, %v615
    %v617 = vsel %vm614, %v616, %v612
    %v618 = vmul.f32 %v595, %v617
    %v619 = vrcp.pop %v603
    %v620 = vmul.f32 %v603, %v619
    %v621 = vsub.f32 1.0, %v620
    %v622 = vmul.f32 %v619, %v621
    %v623 = vadd.f32 %v619, %v622
    %vm624 = vweird.f32 %v603
    %vm625 = vweird.f32 %v619
    %vm626 = vmor %vm624, %vm625
    %v627 = vsel %vm626, %v619, %v623
    %v628 = vand.u32 2147483647, %v603
    %vm629 = vcmp.eq.f32.partialorder %v628, 8.507059e+37
    %v630 = vand.u32 %v603, 2147483648
    %v631 = vor.u32 1.1754944e-38, %v630
    %v632 = vsel %vm629, %v631, %v627
    %v633 = vmul.f32 %v597, %v632
    %634 = vrot.lane.b32.xlu0 %v186, 112
    %v635 = vpop.permute.xlu0 %634
    %636 = vrot.lane.b32.xlu0 %v189, 112
    %v637 = vpop.permute.xlu0 %636
    %v641 = vsel %vm283, %v618, 0
    %v644 = vsel %vm283, %v633, 0
    %646 = vmatpush.msra.mxu0 0.0
    %647 = vmatpush.msra.mxu0 0.0
    %648 = vmatpush.msra.mxu0 0.0
    %649 = vmatpush.msra.mxu0 0.0
    %650 = vmatpush.msra.mxu0 0.0
    %651 = vmatpush.msra.mxu0 0.0
    %652 = vmatpush.msra.mxu0 0.0
    %653 = vmatpush.msra.mxu0 0.0
    %654 = vmatpush.msra.mxu0 0.0
    %655 = vmatpush.msra.mxu0 0.0
    %656 = vmatpush.msra.mxu0 0.0
    %657 = vmatpush.msra.mxu0 0.0
    %658 = vmatpush.msra.mxu0 0.0
    %659 = vmatpush.msra.mxu0 0.0
    %660 = vmatpush.msra.mxu0 %v637
    %661 = vmatpush.msra.mxu0 %v635
    %662 = vmatmul.f32.gmra.mxu0 %v641
    %v663 = vpop.f32.mrf.mxu0
    %v664 = vadd.f32 0.0, %v663
    %665 = vmatmul.f32.gmra.mxu0 %v644
    %v666 = vpop.f32.mrf.mxu0
    %v667 = vadd.f32 0.0, %v666
    %668 = vdwg.mxu0
    %v670 = vsel %vm247, %v664, 0
    %v673 = vsel %vm247, %v667, 0
    %675 = vmatpush.msra.mxu0 0.0
    %676 = vmatpush.msra.mxu0 0.0
    %677 = vmatpush.msra.mxu0 0.0
    %678 = vmatpush.msra.mxu0 0.0
    %679 = vmatpush.msra.mxu0 0.0
    %680 = vmatpush.msra.mxu0 0.0
    %681 = vmatpush.msra.mxu0 0.0
    %682 = vmatpush.msra.mxu0 0.0
    %683 = vmatpush.msra.mxu0 0.0
    %684 = vmatpush.msra.mxu0 0.0
    %685 = vmatpush.msra.mxu0 0.0
    %686 = vmatpush.msra.mxu0 0.0
    %687 = vmatpush.msra.mxu0 0.0
    %688 = vmatpush.msra.mxu0 0.0
    %689 = vmatpush.msra.mxu0 0.0
    %690 = vmatpush.msra.mxu0 %v130
    %691 = vmatmul.f32.gmra.mxu0 %v670
    %v692 = vpop.f32.mrf.mxu0
    %v693 = vadd.f32 0.0, %v692
    %694 = vmatmul.f32.gmra.mxu0 %v673
    %v695 = vpop.f32.mrf.mxu0
    %v696 = vadd.f32 0.0, %v695
    %697 = vdwg.mxu0
    %v698 = vadd.f32 %v540, %v693
    %v699 = vadd.f32 %v543, %v696
    %700 = vrot.lane.b32.xlu0 %v211, 104
    %v701 = vpop.permute.xlu0 %700
    %702 = vrot.lane.b32.xlu0 %v212, 104
    %v703 = vpop.permute.xlu0 %702
    %704 = vrot.lane.b32.xlu0 %v239, 40
    %v705 = vpop.permute.xlu0 %704
    %706 = vrot.lane.b32.xlu0 %v240, 40
    %v707 = vpop.permute.xlu0 %706
    %v708 = vsel %vm247, %v701, 0
    %v710 = vsel %vm247, %v703, 0
    %v712 = vsel %vm247, %v705, 0
    %v714 = vsel %vm247, %v707, 0
    %716 = vmatpush.xpose.msra.mxu0 0.0
    %717 = vmatpush.xpose.msra.mxu0 0.0
    %718 = vmatpush.xpose.msra.mxu0 0.0
    %719 = vmatpush.xpose.msra.mxu0 0.0
    %720 = vmatpush.xpose.msra.mxu0 0.0
    %721 = vmatpush.xpose.msra.mxu0 0.0
    %722 = vmatpush.xpose.msra.mxu0 0.0
    %723 = vmatpush.xpose.msra.mxu0 0.0
    %724 = vmatpush.xpose.msra.mxu0 0.0
    %725 = vmatpush.xpose.msra.mxu0 0.0
    %726 = vmatpush.xpose.msra.mxu0 0.0
    %727 = vmatpush.xpose.msra.mxu0 0.0
    %728 = vmatpush.xpose.msra.mxu0 0.0
    %729 = vmatpush.xpose.msra.mxu0 0.0
    %730 = vmatpush.xpose.msra.mxu0 %v714
    %731 = vmatpush.xpose.msra.mxu0 %v712
    %732 = vmatmul.f32.gmra.mxu0 %v708
    %v733 = vpop.f32.mrf.mxu0
    %v734 = vadd.f32 %v136, %v733
    %735 = vmatmul.f32.gmra.mxu0 %v710
    %v736 = vpop.f32.mrf.mxu0
    %v737 = vadd.f32 %v137, %v736
    %738 = vdwg.mxu0
    %v739 = vmax.f32 %v734, -3.4028235e+38
    %v740 = vmax.f32 %v737, -3.4028235e+38
    %v741 = vsel %vm283, %v739, -inf
    %742 = vmax.xlane.f32.xlu0 %v741
    %v743 = vpop.xlane.xlu0 %742
    %v744 = vsel %vm283, %v740, -inf
    %745 = vmax.xlane.f32.xlu0 %v744
    %v746 = vpop.xlane.xlu0 %745
    %v747 = vsub.f32 %v739, %v743
    %v748 = vsub.f32 %v740, %v746
    %v749 = vmul.f32 %v747, 1.442695
    %v750 = vpow.pop %v749
    %v751 = vmul.f32 %v748, 1.442695
    %v752 = vpow.pop %v751
    %v753 = vsel %vm283, %v750, 0.0
    %754 = vadd.xlane.f32.xlu0 %v753
    %v755 = vpop.xlane.xlu0 %754
    %v756 = vsel %vm283, %v752, 0.0
    %757 = vadd.xlane.f32.xlu0 %v756
    %v758 = vpop.xlane.xlu0 %757
    %v759 = vrcp.pop %v755
    %v760 = vmul.f32 %v755, %v759
    %v761 = vsub.f32 1.0, %v760
    %v762 = vmul.f32 %v759, %v761
    %v763 = vadd.f32 %v759, %v762
    %vm764 = vweird.f32 %v755
    %vm765 = vweird.f32 %v759
    %vm766 = vmor %vm764, %vm765
    %v767 = vsel %vm766, %v759, %v763
    %v768 = vand.u32 2147483647, %v755
    %vm769 = vcmp.eq.f32.partialorder %v768, 8.507059e+37
    %v770 = vand.u32 %v755, 2147483648
    %v771 = vor.u32 1.1754944e-38, %v770
    %v772 = vsel %vm769, %v771, %v767
    %v773 = vmul.f32 %v750, %v772
    %v774 = vrcp.pop %v758
    %v775 = vmul.f32 %v758, %v774
    %v776 = vsub.f32 1.0, %v775
    %v777 = vmul.f32 %v774, %v776
    %v778 = vadd.f32 %v774, %v777
    %vm779 = vweird.f32 %v758
    %vm780 = vweird.f32 %v774
    %vm781 = vmor %vm779, %vm780
    %v782 = vsel %vm781, %v774, %v778
    %v783 = vand.u32 2147483647, %v758
    %vm784 = vcmp.eq.f32.partialorder %v783, 8.507059e+37
    %v785 = vand.u32 %v758, 2147483648
    %v786 = vor.u32 1.1754944e-38, %v785
    %v787 = vsel %vm784, %v786, %v782
    %v788 = vmul.f32 %v752, %v787
    %789 = vrot.lane.b32.xlu0 %v186, 104
    %v790 = vpop.permute.xlu0 %789
    %791 = vrot.lane.b32.xlu0 %v189, 104
    %v792 = vpop.permute.xlu0 %791
    %v796 = vsel %vm283, %v773, 0
    %v799 = vsel %vm283, %v788, 0
    %801 = vmatpush.msra.mxu0 0.0
    %802 = vmatpush.msra.mxu0 0.0
    %803 = vmatpush.msra.mxu0 0.0
    %804 = vmatpush.msra.mxu0 0.0
    %805 = vmatpush.msra.mxu0 0.0
    %806 = vmatpush.msra.mxu0 0.0
    %807 = vmatpush.msra.mxu0 0.0
    %808 = vmatpush.msra.mxu0 0.0
    %809 = vmatpush.msra.mxu0 0.0
    %810 = vmatpush.msra.mxu0 0.0
    %811 = vmatpush.msra.mxu0 0.0
    %812 = vmatpush.msra.mxu0 0.0
    %813 = vmatpush.msra.mxu0 0.0
    %814 = vmatpush.msra.mxu0 0.0
    %815 = vmatpush.msra.mxu0 %v792
    %816 = vmatpush.msra.mxu0 %v790
    %817 = vmatmul.f32.gmra.mxu0 %v796
    %v818 = vpop.f32.mrf.mxu0
    %v819 = vadd.f32 0.0, %v818
    %820 = vmatmul.f32.gmra.mxu0 %v799
    %v821 = vpop.f32.mrf.mxu0
    %v822 = vadd.f32 0.0, %v821
    %823 = vdwg.mxu0
    %v825 = vsel %vm247, %v819, 0
    %v828 = vsel %vm247, %v822, 0
    %830 = vmatpush.msra.mxu0 0.0
    %831 = vmatpush.msra.mxu0 0.0
    %832 = vmatpush.msra.mxu0 0.0
    %833 = vmatpush.msra.mxu0 0.0
    %834 = vmatpush.msra.mxu0 0.0
    %835 = vmatpush.msra.mxu0 0.0
    %836 = vmatpush.msra.mxu0 0.0
    %837 = vmatpush.msra.mxu0 0.0
    %838 = vmatpush.msra.mxu0 0.0
    %839 = vmatpush.msra.mxu0 0.0
    %840 = vmatpush.msra.mxu0 0.0
    %841 = vmatpush.msra.mxu0 0.0
    %842 = vmatpush.msra.mxu0 0.0
    %843 = vmatpush.msra.mxu0 0.0
    %844 = vmatpush.msra.mxu0 0.0
    %845 = vmatpush.msra.mxu0 %v131
    %846 = vmatmul.f32.gmra.mxu0 %v825
    %v847 = vpop.f32.mrf.mxu0
    %v848 = vadd.f32 0.0, %v847
    %849 = vmatmul.f32.gmra.mxu0 %v828
    %v850 = vpop.f32.mrf.mxu0
    %v851 = vadd.f32 0.0, %v850
    %852 = vdwg.mxu0
    %v853 = vadd.f32 %v698, %v848
    %v854 = vadd.f32 %v699, %v851
    %855 = vst.msk [vmem:[#allocation13] sm:$0xff] %vm138, %v853
    %856 = vst.msk [vmem:[#allocation13 + $0x8] sm:$0xff] %vm138, %v854
    // Predicated region
    $region50: #{tpu_custom_call.1} parent=1 // pred_check
      _
    $region51: #{tpu_custom_call.1} parent=1 // pred_check_branch
      %858 = sbr.rel (0) target = $region53
    $region52: #{tpu_custom_call.1} parent=1 // pred_region
      %860 = vsyncadd [#allocation4], 0
      %s861 = sshll.u32 [#allocation13], 4
      %s862 = int_to_ptr.vmem [resolvable:$true] %s861
      %s863 = sshll.u32 %s6, 4
      %s864 = int_to_ptr.hbm [resolvable:$true] %s863
      %869 = dma.vmem_to_hbm [thread:$0]  %s862, 256, %s864, [#allocation4], 128, 128, 8
    $region53: #{tpu_custom_call.1} parent=1 // pred_fallthru
      _
    // Predicated region
    $region54: #{tpu_custom_call.1} parent=1 // pred_check
      _
    $region55: #{tpu_custom_call.1} parent=1 // pred_check_branch
      %871 = sbr.rel (0) target = $region57
    $region56: #{tpu_custom_call.1} parent=1 // pred_region
      %873 = dma.done [#allocation4], 256
    $region57: #{tpu_custom_call.1} parent=1 // pred_fallthru
      _
    %874 = vsyncpa [#allocation3], 1
    %875 = vsyncpa [#allocation6], 1
    %876 = vsyncpa [#allocation9], 1
    %877 = vsyncpa [#allocation12], 1
    %878 = vsyncpa [#allocation4], 1

</llo_original>
